<compile_context>
chip_gen: v5e
topology: v5e:2x2
jax: 0.10.0
libtpu: 0.0.40
codegen_flags: <defaults>
</compile_context>

<pallas_src>
import math

import jax
import jax.numpy as jnp
from jax.experimental import pallas as pl
from jax.experimental.pallas import tpu as pltpu


# ----------------------------------------------------------------------------
# Fused TemporalBlock kernel
# ----------------------------------------------------------------------------

def _make_block_kernel(K, dil, L, has_ds):
    """Fused: relu(conv2(relu(conv1(x))) + residual(x)).

    Refs (per grid step = one batch group laid out as (C, BG*L)):
      x_ref   : (C_in,  T)            lane-dense activation slab
      w1_ref  : (C_out, K*C_in)       conv1 weight, taps packed into lanes
      b1_ref  : (C_out, 1)
      w2_ref  : (C_out, K*C_out)      conv2 weight, taps packed into lanes
      b2_ref  : (C_out, 1)
      [wds_ref: (C_out, C_in)]        1x1 downsample (only if has_ds)
      [bds_ref: (C_out, 1)]
      out_ref : (C_out, T)
    """

    def _stack_taps(x):
        # x: (C, T) -> (K*C, T); block j is x causally shifted right by
        # (K-1-j)*dil with zero fill, independently per length-L time segment.
        C, T = x.shape
        pos = jax.lax.broadcasted_iota(jnp.int32, (C, T), 1) % L
        parts = []
        for j in range(K):
            s = (K - 1 - j) * dil
            if s == 0:
                parts.append(x)
            else:
                rolled = jnp.roll(x, s, axis=1)          # wrap is masked below
                parts.append(jnp.where(pos >= s, rolled, 0.0))
        return jnp.concatenate(parts, axis=0)

    def kernel(x_ref, w1_ref, b1_ref, w2_ref, b2_ref, *rest):
        if has_ds:
            wds_ref, bds_ref, out_ref = rest
        else:
            (out_ref,) = rest

        x = x_ref[...]                                   # (C_in, T)

        # conv1 -> chomp -> relu  (single MXU matmul over packed taps)
        h1 = jnp.dot(w1_ref[...], _stack_taps(x),
                     preferred_element_type=jnp.float32) + b1_ref[...]
        h1 = jnp.maximum(h1, 0.0)

        # conv2 -> chomp -> relu  (h1 stays in registers/VMEM, never hits HBM)
        h2 = jnp.dot(w2_ref[...], _stack_taps(h1),
                     preferred_element_type=jnp.float32) + b2_ref[...]
        h2 = jnp.maximum(h2, 0.0)

        # residual path (1x1 conv if channel mismatch), fused final relu
        if has_ds:
            res = jnp.dot(wds_ref[...], x,
                          preferred_element_type=jnp.float32) + bds_ref[...]
        else:
            res = x
        out_ref[...] = jnp.maximum(h2 + res, 0.0).astype(out_ref.dtype)

    return kernel


def _pick_batch_group(B, L, max_lanes=16384):
    """Smallest batch group whose lane width (BG*L) is a multiple of 128."""
    g0 = 128 // math.gcd(L, 128)
    for bg in range(g0, B + 1, g0):
        if B % bg == 0 and bg * L <= max_lanes:
            return bg
    return B   # tiny / awkward shapes: single step over the whole slab


def temporal_block_fused(x_cl, blk, *, dil, K, L, B):
    """x_cl: (C_in, B*L)  ->  (C_out, B*L). One pallas_call per block."""
    C_in, T = x_cl.shape
    C_out = blk["b1"].shape[0]
    has_ds = blk["w_ds"] is not None

    BG = _pick_batch_group(B, L)
    TL = BG * L
    grid = (B // BG,)

    kernel = _make_block_kernel(K, dil, L, has_ds)

    in_specs = [
        pl.BlockSpec((C_in, TL), lambda i: (0, i)),
        pl.BlockSpec((C_out, K * C_in), lambda i: (0, 0)),
        pl.BlockSpec((C_out, 1), lambda i: (0, 0)),
        pl.BlockSpec((C_out, K * C_out), lambda i: (0, 0)),
        pl.BlockSpec((C_out, 1), lambda i: (0, 0)),
    ]
    args = [x_cl, blk["w1"], blk["b1"], blk["w2"], blk["b2"]]
    if has_ds:
        in_specs += [pl.BlockSpec((C_out, C_in), lambda i: (0, 0)),
                     pl.BlockSpec((C_out, 1), lambda i: (0, 0))]
        args += [blk["w_ds"], blk["b_ds"]]

    return pl.pallas_call(
        kernel,
        grid=grid,
        in_specs=in_specs,
        out_specs=pl.BlockSpec((C_out, TL), lambda i: (0, i)),
        out_shape=jax.ShapeDtypeStruct((C_out, T), jnp.float32),
        compiler_params=pltpu.CompilerParams(dimension_semantics=("parallel",)),
    )(*args)


# ----------------------------------------------------------------------------
# Dense (Linear) layer, tiled over the flattened-feature reduction axis
# ----------------------------------------------------------------------------

def _dense_kernel(x_ref, w_ref, b_ref, o_ref, acc_ref):
    k = pl.program_id(0)

    @pl.when(k == 0)
    def _():
        acc_ref[...] = jnp.zeros_like(acc_ref)

    acc_ref[...] += jnp.dot(x_ref[...], w_ref[...],
                            preferred_element_type=jnp.float32)

    @pl.when(k == pl.num_programs(0) - 1)
    def _():
        o_ref[...] = (acc_ref[...] + b_ref[...]).astype(o_ref.dtype)


def dense(x_flat, w, b):
    """x_flat: (B, F); w: (F, O); b: (1, O) -> (B, O)."""
    B, F = x_flat.shape
    O = w.shape[1]
    TF = F
    for cand in (512, 256, 128):   # prefer large 128-multiple reduction tiles
        if F % cand == 0:
            TF = cand
            break
    grid = (F // TF,)
    return pl.pallas_call(
        _dense_kernel,
        grid=grid,
        in_specs=[pl.BlockSpec((B, TF), lambda k: (0, k)),
                  pl.BlockSpec((TF, O), lambda k: (k, 0)),
                  pl.BlockSpec((1, O), lambda k: (0, 0))],
        out_specs=pl.BlockSpec((B, O), lambda k: (0, 0)),
        out_shape=jax.ShapeDtypeStruct((B, O), jnp.float32),
        scratch_shapes=[pltpu.VMEM((B, O), jnp.float32)],
        compiler_params=pltpu.CompilerParams(
            dimension_semantics=("arbitrary",)),
    )(x_flat, w, b)


# ----------------------------------------------------------------------------
# Parameter setup (deterministic, synthetic) + forward glue
# ----------------------------------------------------------------------------

def _weight_norm(v, g):
    # v: (C_out, C_in, K); g: (C_out,); norm over dims (1,2) per out-channel
    norm = jnp.sqrt(jnp.sum(v * v, axis=(1, 2), keepdims=True))
    return g[:, None, None] * v / norm


def init_tcn_params(key, seq_len, num_inputs, num_channels, out_channels, kernel_size):
    params = {"blocks": []}
    keys = jax.random.split(key, 4 * len(num_channels) + 2)
    ki = 0
    for i, c_out in enumerate(num_channels):
        c_in = num_inputs if i == 0 else num_channels[i - 1]
        blk = {}
        for name, (ci, co) in (("1", (c_in, c_out)), ("2", (c_out, c_out))):
            v = 0.01 * jax.random.normal(keys[ki], (co, ci, kernel_size), jnp.float32)
            g = jnp.sqrt(jnp.sum(v * v, axis=(1, 2)))   # weight_norm default g=||v||
            w = _weight_norm(v, g)                      # effective conv weight (co,ci,K)
            bkey = jax.random.split(keys[ki], 2)[0]
            b = 0.01 * jax.random.normal(bkey, (co,), jnp.float32)
            # pack taps into the contraction axis: Wpack[o, j*ci + c] = w[o, c, j]
            blk["w" + name] = jnp.transpose(w, (0, 2, 1)).reshape(co, kernel_size * ci)
            blk["b" + name] = b.reshape(co, 1)
            ki += 1
        if c_in != c_out:
            w_ds = 0.01 * jax.random.normal(keys[ki], (c_out, c_in, 1), jnp.float32)
            bkey = jax.random.split(keys[ki], 2)[0]
            b_ds = 0.01 * jax.random.normal(bkey, (c_out,), jnp.float32)
            blk["w_ds"] = w_ds[:, :, 0]                 # (c_out, c_in)
            blk["b_ds"] = b_ds.reshape(c_out, 1)
            ki += 1
        else:
            blk["w_ds"] = None
            blk["b_ds"] = None
        params["blocks"].append(blk)

    F = seq_len * num_channels[-1]
    w_dense = 0.05 * jax.random.normal(keys[ki], (out_channels, F), jnp.float32)
    b_dense = 0.05 * jax.random.normal(keys[ki + 1], (out_channels,), jnp.float32)
    params["w_dense"] = jnp.transpose(w_dense)          # (F, O)
    params["b_dense"] = b_dense.reshape(1, out_channels)
    return params


def tcn_forward(x_ncl, params, num_channels, kernel_size):
    B, C_in0, L = x_ncl.shape
    # NCL -> lane-dense (C, B*L) layout, time as the last/lane axis.
    h = jnp.transpose(x_ncl, (1, 0, 2)).reshape(C_in0, B * L)
    for i, blk in enumerate(params["blocks"]):
        dil = 2 ** i
        h = temporal_block_fused(h, blk, dil=dil, K=kernel_size, L=L, B=B)
    C_last = num_channels[-1]
    # torch .flatten(start_dim=1) on (B, C, L) -> (B, C*L), channel-major
    h_flat = jnp.transpose(h.reshape(C_last, B, L), (1, 0, 2)).reshape(B, C_last * L)
    # dropout = identity at inference
    return dense(h_flat, params["w_dense"], params["b_dense"])


# ----------------------------------------------------------------------------
# Demo
# ----------------------------------------------------------------------------

if __name__ == "__main__":
    seq_len = 16
    num_inputs = 4
    num_channels = [8, 8]
    out_channels = 8
    kernel_size = 3
    batch = 2

    key = jax.random.PRNGKey(0)
    k_x, k_p = jax.random.split(key)
    x = jax.random.normal(k_x, (batch, num_inputs, seq_len), jnp.float32)  # NCL
    params = init_tcn_params(k_p, seq_len, num_inputs, num_channels,
                             out_channels, kernel_size)

    fwd = jax.jit(lambda xx, pp: tcn_forward(xx, pp, num_channels, kernel_size))
    out = fwd(x, params)
    out = jax.block_until_ready(out)
    assert out.shape == (batch, out_channels)
    print("KERNEL_OK")
</pallas_src>

<mosaic_0001>
module attributes {stable_mosaic.version = 11 : i64} {
  func.func @kernel(%arg0: i32, %arg1: memref<8x32xf32, #tpu.memory_space<vmem>>, %arg2: memref<8x24xf32, #tpu.memory_space<vmem>>, %arg3: memref<8x1xf32, #tpu.memory_space<vmem>>, %arg4: memref<8x24xf32, #tpu.memory_space<vmem>>, %arg5: memref<8x1xf32, #tpu.memory_space<vmem>>, %arg6: memref<8x32xf32, #tpu.memory_space<vmem>>) attributes {dimension_semantics = [#tpu.dimension_semantics<parallel>], iteration_bounds = array<i64: 1>, scalar_prefetch = 0 : i64, scratch_operands = 0 : i64, tpu.core_type = #tpu.core_type<tc>, window_params = [{transform_indices = @transform_0, window_bounds = array<i64: 8, 32>}, {pipeline_mode = #tpu.pipeline_mode<synchronous>, transform_indices = @transform_1, window_bounds = array<i64: 8, 24>}, {pipeline_mode = #tpu.pipeline_mode<synchronous>, transform_indices = @transform_2, window_bounds = array<i64: 8, 1>}, {pipeline_mode = #tpu.pipeline_mode<synchronous>, transform_indices = @transform_3, window_bounds = array<i64: 8, 24>}, {pipeline_mode = #tpu.pipeline_mode<synchronous>, transform_indices = @transform_4, window_bounds = array<i64: 8, 1>}, {transform_indices = @transform_5, window_bounds = array<i64: 8, 32>}]} {
    %c0 = arith.constant 0 : index
    %c0_0 = arith.constant 0 : index
    %0 = vector.load %arg1[%c0, %c0_0] : memref<8x32xf32, #tpu.memory_space<vmem>>, vector<8x32xf32>
    %c0_1 = arith.constant 0 : index
    %c0_2 = arith.constant 0 : index
    %1 = vector.load %arg2[%c0_1, %c0_2] : memref<8x24xf32, #tpu.memory_space<vmem>>, vector<8x24xf32>
    %2 = tpu.iota {dimensions = array<i32: 1>} : vector<8x32xi32>
    %c16_i32 = arith.constant 16 : i32
    %c0_i32 = arith.constant 0 : i32
    %3 = arith.cmpi eq, %c16_i32, %c0_i32 : i32
    %c1_i32 = arith.constant 1 : i32
    %4 = arith.select %3, %c1_i32, %c16_i32 : i32
    %5 = vector.broadcast %4 : i32 to vector<8x32xi32>
    %6 = arith.remsi %2, %5 : vector<8x32xi32>
    %c0_i32_3 = arith.constant 0 : i32
    %7 = vector.broadcast %c0_i32_3 : i32 to vector<8x32xi32>
    %8 = arith.cmpi ne, %6, %7 : vector<8x32xi32>
    %c0_i32_4 = arith.constant 0 : i32
    %9 = vector.broadcast %c0_i32_4 : i32 to vector<8x32xi32>
    %10 = arith.cmpi slt, %6, %9 : vector<8x32xi32>
    %c0_i32_5 = arith.constant 0 : i32
    %11 = arith.cmpi slt, %4, %c0_i32_5 : i32
    %12 = vector.broadcast %11 : i1 to vector<8x32xi1>
    %13 = vector.broadcast %12 : vector<8x32xi1> to vector<8x32xi1>
    %14 = arith.xori %10, %13 : vector<8x32xi1>
    %15 = arith.andi %14, %8 : vector<8x32xi1>
    %16 = vector.broadcast %4 : i32 to vector<8x32xi32>
    %17 = arith.addi %6, %16 : vector<8x32xi32>
    %18 = arith.select %15, %17, %6 : vector<8x32xi1>, vector<8x32xi32>
    %19 = vector.extract_strided_slice %0 {offsets = [0, 28], sizes = [8, 4], strides = [1, 1]} : vector<8x32xf32> to vector<8x4xf32>
    %20 = vector.extract_strided_slice %0 {offsets = [0, 0], sizes = [8, 28], strides = [1, 1]} : vector<8x32xf32> to vector<8x28xf32>
    %21 = tpu.concatenate %19, %20 in 1 : vector<8x4xf32>, vector<8x28xf32> -> vector<8x32xf32>
    %c4_i32 = arith.constant 4 : i32
    %22 = vector.broadcast %c4_i32 : i32 to vector<8x32xi32>
    %23 = arith.cmpi sge, %18, %22 : vector<8x32xi32>
    %cst = arith.constant 0.000000e+00 : f32
    %24 = vector.broadcast %cst : f32 to vector<8x32xf32>
    %25 = arith.select %23, %21, %24 : vector<8x32xi1>, vector<8x32xf32>
    %26 = vector.extract_strided_slice %0 {offsets = [0, 30], sizes = [8, 2], strides = [1, 1]} : vector<8x32xf32> to vector<8x2xf32>
    %27 = vector.extract_strided_slice %0 {offsets = [0, 0], sizes = [8, 30], strides = [1, 1]} : vector<8x32xf32> to vector<8x30xf32>
    %28 = tpu.concatenate %26, %27 in 1 : vector<8x2xf32>, vector<8x30xf32> -> vector<8x32xf32>
    %c2_i32 = arith.constant 2 : i32
    %29 = vector.broadcast %c2_i32 : i32 to vector<8x32xi32>
    %30 = arith.cmpi sge, %18, %29 : vector<8x32xi32>
    %cst_6 = arith.constant 0.000000e+00 : f32
    %31 = vector.broadcast %cst_6 : f32 to vector<8x32xf32>
    %32 = arith.select %30, %28, %31 : vector<8x32xi1>, vector<8x32xf32>
    %33 = tpu.concatenate %25, %32, %0 in 0 : vector<8x32xf32>, vector<8x32xf32>, vector<8x32xf32> -> vector<24x32xf32>
    %cst_7 = arith.constant dense<0.000000e+00> : vector<8x32xf32>
    %34 = tpu.matmul %1, %33, %cst_7 {dimension_numbers = #tpu.dot_dimension_numbers<[1], [0], [0], [1], [0, 0, 1, 1], [], []>} : vector<8x24xf32>, vector<24x32xf32>, vector<8x32xf32> -> vector<8x32xf32>
    %c0_8 = arith.constant 0 : index
    %c0_9 = arith.constant 0 : index
    %35 = vector.load %arg3[%c0_8, %c0_9] : memref<8x1xf32, #tpu.memory_space<vmem>>, vector<8x1xf32>
    %36 = vector.broadcast %35 : vector<8x1xf32> to vector<8x32xf32>
    %37 = arith.addf %34, %36 : vector<8x32xf32>
    %cst_10 = arith.constant 0.000000e+00 : f32
    %38 = vector.broadcast %cst_10 : f32 to vector<8x32xf32>
    %39 = arith.maximumf %37, %38 : vector<8x32xf32>
    %c0_11 = arith.constant 0 : index
    %c0_12 = arith.constant 0 : index
    %40 = vector.load %arg4[%c0_11, %c0_12] : memref<8x24xf32, #tpu.memory_space<vmem>>, vector<8x24xf32>
    %41 = tpu.iota {dimensions = array<i32: 1>} : vector<8x32xi32>
    %c16_i32_13 = arith.constant 16 : i32
    %c0_i32_14 = arith.constant 0 : i32
    %42 = arith.cmpi eq, %c16_i32_13, %c0_i32_14 : i32
    %c1_i32_15 = arith.constant 1 : i32
    %43 = arith.select %42, %c1_i32_15, %c16_i32_13 : i32
    %44 = vector.broadcast %43 : i32 to vector<8x32xi32>
    %45 = arith.remsi %41, %44 : vector<8x32xi32>
    %c0_i32_16 = arith.constant 0 : i32
    %46 = vector.broadcast %c0_i32_16 : i32 to vector<8x32xi32>
    %47 = arith.cmpi ne, %45, %46 : vector<8x32xi32>
    %c0_i32_17 = arith.constant 0 : i32
    %48 = vector.broadcast %c0_i32_17 : i32 to vector<8x32xi32>
    %49 = arith.cmpi slt, %45, %48 : vector<8x32xi32>
    %c0_i32_18 = arith.constant 0 : i32
    %50 = arith.cmpi slt, %43, %c0_i32_18 : i32
    %51 = vector.broadcast %50 : i1 to vector<8x32xi1>
    %52 = vector.broadcast %51 : vector<8x32xi1> to vector<8x32xi1>
    %53 = arith.xori %49, %52 : vector<8x32xi1>
    %54 = arith.andi %53, %47 : vector<8x32xi1>
    %55 = vector.broadcast %43 : i32 to vector<8x32xi32>
    %56 = arith.addi %45, %55 : vector<8x32xi32>
    %57 = arith.select %54, %56, %45 : vector<8x32xi1>, vector<8x32xi32>
    %58 = vector.extract_strided_slice %39 {offsets = [0, 28], sizes = [8, 4], strides = [1, 1]} : vector<8x32xf32> to vector<8x4xf32>
    %59 = vector.extract_strided_slice %39 {offsets = [0, 0], sizes = [8, 28], strides = [1, 1]} : vector<8x32xf32> to vector<8x28xf32>
    %60 = tpu.concatenate %58, %59 in 1 : vector<8x4xf32>, vector<8x28xf32> -> vector<8x32xf32>
    %c4_i32_19 = arith.constant 4 : i32
    %61 = vector.broadcast %c4_i32_19 : i32 to vector<8x32xi32>
    %62 = arith.cmpi sge, %57, %61 : vector<8x32xi32>
    %cst_20 = arith.constant 0.000000e+00 : f32
    %63 = vector.broadcast %cst_20 : f32 to vector<8x32xf32>
    %64 = arith.select %62, %60, %63 : vector<8x32xi1>, vector<8x32xf32>
    %65 = vector.extract_strided_slice %39 {offsets = [0, 30], sizes = [8, 2], strides = [1, 1]} : vector<8x32xf32> to vector<8x2xf32>
    %66 = vector.extract_strided_slice %39 {offsets = [0, 0], sizes = [8, 30], strides = [1, 1]} : vector<8x32xf32> to vector<8x30xf32>
    %67 = tpu.concatenate %65, %66 in 1 : vector<8x2xf32>, vector<8x30xf32> -> vector<8x32xf32>
    %c2_i32_21 = arith.constant 2 : i32
    %68 = vector.broadcast %c2_i32_21 : i32 to vector<8x32xi32>
    %69 = arith.cmpi sge, %57, %68 : vector<8x32xi32>
    %cst_22 = arith.constant 0.000000e+00 : f32
    %70 = vector.broadcast %cst_22 : f32 to vector<8x32xf32>
    %71 = arith.select %69, %67, %70 : vector<8x32xi1>, vector<8x32xf32>
    %72 = tpu.concatenate %64, %71, %39 in 0 : vector<8x32xf32>, vector<8x32xf32>, vector<8x32xf32> -> vector<24x32xf32>
    %cst_23 = arith.constant dense<0.000000e+00> : vector<8x32xf32>
    %73 = tpu.matmul %40, %72, %cst_23 {dimension_numbers = #tpu.dot_dimension_numbers<[1], [0], [0], [1], [0, 0, 1, 1], [], []>} : vector<8x24xf32>, vector<24x32xf32>, vector<8x32xf32> -> vector<8x32xf32>
    %c0_24 = arith.constant 0 : index
    %c0_25 = arith.constant 0 : index
    %74 = vector.load %arg5[%c0_24, %c0_25] : memref<8x1xf32, #tpu.memory_space<vmem>>, vector<8x1xf32>
    %75 = vector.broadcast %74 : vector<8x1xf32> to vector<8x32xf32>
    %76 = arith.addf %73, %75 : vector<8x32xf32>
    %cst_26 = arith.constant 0.000000e+00 : f32
    %77 = vector.broadcast %cst_26 : f32 to vector<8x32xf32>
    %78 = arith.maximumf %76, %77 : vector<8x32xf32>
    %79 = arith.addf %78, %0 : vector<8x32xf32>
    %cst_27 = arith.constant 0.000000e+00 : f32
    %80 = vector.broadcast %cst_27 : f32 to vector<8x32xf32>
    %81 = arith.maximumf %79, %80 : vector<8x32xf32>
    %c0_28 = arith.constant 0 : index
    %c0_29 = arith.constant 0 : index
    %82 = vector.load %arg6[%c0_28, %c0_29] : memref<8x32xf32, #tpu.memory_space<vmem>>, vector<8x32xf32>
    tpu.vector_store %arg6[%c0_28, %c0_29], %81 {strides = array<i32>} : memref<8x32xf32, #tpu.memory_space<vmem>>, vector<8x32xf32>,
    return
  }
  func.func @transform_0(%arg0: i32) -> (i32, i32) {
    %c0_i32 = arith.constant 0 : i32
    %c0_i32_0 = arith.constant 0 : i32
    return %c0_i32, %arg0 : i32, i32
  }
  func.func @transform_1(%arg0: i32) -> (i32, i32) {
    %c0_i32 = arith.constant 0 : i32
    %c0_i32_0 = arith.constant 0 : i32
    %c0_i32_1 = arith.constant 0 : i32
    return %c0_i32, %c0_i32_0 : i32, i32
  }
  func.func @transform_2(%arg0: i32) -> (i32, i32) {
    %c0_i32 = arith.constant 0 : i32
    %c0_i32_0 = arith.constant 0 : i32
    %c0_i32_1 = arith.constant 0 : i32
    return %c0_i32, %c0_i32_0 : i32, i32
  }
  func.func @transform_3(%arg0: i32) -> (i32, i32) {
    %c0_i32 = arith.constant 0 : i32
    %c0_i32_0 = arith.constant 0 : i32
    %c0_i32_1 = arith.constant 0 : i32
    return %c0_i32, %c0_i32_0 : i32, i32
  }
  func.func @transform_4(%arg0: i32) -> (i32, i32) {
    %c0_i32 = arith.constant 0 : i32
    %c0_i32_0 = arith.constant 0 : i32
    %c0_i32_1 = arith.constant 0 : i32
    return %c0_i32, %c0_i32_0 : i32, i32
  }
  func.func @transform_5(%arg0: i32) -> (i32, i32) {
    %c0_i32 = arith.constant 0 : i32
    %c0_i32_0 = arith.constant 0 : i32
    return %c0_i32, %arg0 : i32, i32
  }
}

module attributes {stable_mosaic.version = 11 : i64} {
  func.func @kernel(%arg0: i32, %arg1: memref<4x32xf32, #tpu.memory_space<vmem>>, %arg2: memref<8x12xf32, #tpu.memory_space<vmem>>, %arg3: memref<8x1xf32, #tpu.memory_space<vmem>>, %arg4: memref<8x24xf32, #tpu.memory_space<vmem>>, %arg5: memref<8x1xf32, #tpu.memory_space<vmem>>, %arg6: memref<8x4xf32, #tpu.memory_space<vmem>>, %arg7: memref<8x1xf32, #tpu.memory_space<vmem>>, %arg8: memref<8x32xf32, #tpu.memory_space<vmem>>) attributes {dimension_semantics = [#tpu.dimension_semantics<parallel>], iteration_bounds = array<i64: 1>, scalar_prefetch = 0 : i64, scratch_operands = 0 : i64, tpu.core_type = #tpu.core_type<tc>, window_params = [{transform_indices = @transform_0, window_bounds = array<i64: 4, 32>}, {pipeline_mode = #tpu.pipeline_mode<synchronous>, transform_indices = @transform_1, window_bounds = array<i64: 8, 12>}, {pipeline_mode = #tpu.pipeline_mode<synchronous>, transform_indices = @transform_2, window_bounds = array<i64: 8, 1>}, {pipeline_mode = #tpu.pipeline_mode<synchronous>, transform_indices = @transform_3, window_bounds = array<i64: 8, 24>}, {pipeline_mode = #tpu.pipeline_mode<synchronous>, transform_indices = @transform_4, window_bounds = array<i64: 8, 1>}, {pipeline_mode = #tpu.pipeline_mode<synchronous>, transform_indices = @transform_5, window_bounds = array<i64: 8, 4>}, {pipeline_mode = #tpu.pipeline_mode<synchronous>, transform_indices = @transform_6, window_bounds = array<i64: 8, 1>}, {transform_indices = @transform_7, window_bounds = array<i64: 8, 32>}]} {
    %c0 = arith.constant 0 : index
    %c0_0 = arith.constant 0 : index
    %0 = vector.load %arg1[%c0, %c0_0] : memref<4x32xf32, #tpu.memory_space<vmem>>, vector<4x32xf32>
    %c0_1 = arith.constant 0 : index
    %c0_2 = arith.constant 0 : index
    %1 = vector.load %arg2[%c0_1, %c0_2] : memref<8x12xf32, #tpu.memory_space<vmem>>, vector<8x12xf32>
    %2 = tpu.iota {dimensions = array<i32: 1>} : vector<4x32xi32>
    %c16_i32 = arith.constant 16 : i32
    %c0_i32 = arith.constant 0 : i32
    %3 = arith.cmpi eq, %c16_i32, %c0_i32 : i32
    %c1_i32 = arith.constant 1 : i32
    %4 = arith.select %3, %c1_i32, %c16_i32 : i32
    %5 = vector.broadcast %4 : i32 to vector<4x32xi32>
    %6 = arith.remsi %2, %5 : vector<4x32xi32>
    %c0_i32_3 = arith.constant 0 : i32
    %7 = vector.broadcast %c0_i32_3 : i32 to vector<4x32xi32>
    %8 = arith.cmpi ne, %6, %7 : vector<4x32xi32>
    %c0_i32_4 = arith.constant 0 : i32
    %9 = vector.broadcast %c0_i32_4 : i32 to vector<4x32xi32>
    %10 = arith.cmpi slt, %6, %9 : vector<4x32xi32>
    %c0_i32_5 = arith.constant 0 : i32
    %11 = arith.cmpi slt, %4, %c0_i32_5 : i32
    %12 = vector.broadcast %11 : i1 to vector<4x32xi1>
    %13 = vector.broadcast %12 : vector<4x32xi1> to vector<4x32xi1>
    %14 = arith.xori %10, %13 : vector<4x32xi1>
    %15 = arith.andi %14, %8 : vector<4x32xi1>
    %16 = vector.broadcast %4 : i32 to vector<4x32xi32>
    %17 = arith.addi %6, %16 : vector<4x32xi32>
    %18 = arith.select %15, %17, %6 : vector<4x32xi1>, vector<4x32xi32>
    %19 = vector.extract_strided_slice %0 {offsets = [0, 30], sizes = [4, 2], strides = [1, 1]} : vector<4x32xf32> to vector<4x2xf32>
    %20 = vector.extract_strided_slice %0 {offsets = [0, 0], sizes = [4, 30], strides = [1, 1]} : vector<4x32xf32> to vector<4x30xf32>
    %21 = tpu.concatenate %19, %20 in 1 : vector<4x2xf32>, vector<4x30xf32> -> vector<4x32xf32>
    %c2_i32 = arith.constant 2 : i32
    %22 = vector.broadcast %c2_i32 : i32 to vector<4x32xi32>
    %23 = arith.cmpi sge, %18, %22 : vector<4x32xi32>
    %cst = arith.constant 0.000000e+00 : f32
    %24 = vector.broadcast %cst : f32 to vector<4x32xf32>
    %25 = arith.select %23, %21, %24 : vector<4x32xi1>, vector<4x32xf32>
    %26 = vector.extract_strided_slice %0 {offsets = [0, 31], sizes = [4, 1], strides = [1, 1]} : vector<4x32xf32> to vector<4x1xf32>
    %27 = vector.extract_strided_slice %0 {offsets = [0, 0], sizes = [4, 31], strides = [1, 1]} : vector<4x32xf32> to vector<4x31xf32>
    %28 = tpu.concatenate %26, %27 in 1 : vector<4x1xf32>, vector<4x31xf32> -> vector<4x32xf32>
    %c1_i32_6 = arith.constant 1 : i32
    %29 = vector.broadcast %c1_i32_6 : i32 to vector<4x32xi32>
    %30 = arith.cmpi sge, %18, %29 : vector<4x32xi32>
    %cst_7 = arith.constant 0.000000e+00 : f32
    %31 = vector.broadcast %cst_7 : f32 to vector<4x32xf32>
    %32 = arith.select %30, %28, %31 : vector<4x32xi1>, vector<4x32xf32>
    %33 = tpu.concatenate %25, %32, %0 in 0 : vector<4x32xf32>, vector<4x32xf32>, vector<4x32xf32> -> vector<12x32xf32>
    %cst_8 = arith.constant dense<0.000000e+00> : vector<8x32xf32>
    %34 = tpu.matmul %1, %33, %cst_8 {dimension_numbers = #tpu.dot_dimension_numbers<[1], [0], [0], [1], [0, 0, 1, 1], [], []>} : vector<8x12xf32>, vector<12x32xf32>, vector<8x32xf32> -> vector<8x32xf32>
    %c0_9 = arith.constant 0 : index
    %c0_10 = arith.constant 0 : index
    %35 = vector.load %arg3[%c0_9, %c0_10] : memref<8x1xf32, #tpu.memory_space<vmem>>, vector<8x1xf32>
    %36 = vector.broadcast %35 : vector<8x1xf32> to vector<8x32xf32>
    %37 = arith.addf %34, %36 : vector<8x32xf32>
    %cst_11 = arith.constant 0.000000e+00 : f32
    %38 = vector.broadcast %cst_11 : f32 to vector<8x32xf32>
    %39 = arith.maximumf %37, %38 : vector<8x32xf32>
    %c0_12 = arith.constant 0 : index
    %c0_13 = arith.constant 0 : index
    %40 = vector.load %arg4[%c0_12, %c0_13] : memref<8x24xf32, #tpu.memory_space<vmem>>, vector<8x24xf32>
    %41 = tpu.iota {dimensions = array<i32: 1>} : vector<8x32xi32>
    %c16_i32_14 = arith.constant 16 : i32
    %c0_i32_15 = arith.constant 0 : i32
    %42 = arith.cmpi eq, %c16_i32_14, %c0_i32_15 : i32
    %c1_i32_16 = arith.constant 1 : i32
    %43 = arith.select %42, %c1_i32_16, %c16_i32_14 : i32
    %44 = vector.broadcast %43 : i32 to vector<8x32xi32>
    %45 = arith.remsi %41, %44 : vector<8x32xi32>
    %c0_i32_17 = arith.constant 0 : i32
    %46 = vector.broadcast %c0_i32_17 : i32 to vector<8x32xi32>
    %47 = arith.cmpi ne, %45, %46 : vector<8x32xi32>
    %c0_i32_18 = arith.constant 0 : i32
    %48 = vector.broadcast %c0_i32_18 : i32 to vector<8x32xi32>
    %49 = arith.cmpi slt, %45, %48 : vector<8x32xi32>
    %c0_i32_19 = arith.constant 0 : i32
    %50 = arith.cmpi slt, %43, %c0_i32_19 : i32
    %51 = vector.broadcast %50 : i1 to vector<8x32xi1>
    %52 = vector.broadcast %51 : vector<8x32xi1> to vector<8x32xi1>
    %53 = arith.xori %49, %52 : vector<8x32xi1>
    %54 = arith.andi %53, %47 : vector<8x32xi1>
    %55 = vector.broadcast %43 : i32 to vector<8x32xi32>
    %56 = arith.addi %45, %55 : vector<8x32xi32>
    %57 = arith.select %54, %56, %45 : vector<8x32xi1>, vector<8x32xi32>
    %58 = vector.extract_strided_slice %39 {offsets = [0, 30], sizes = [8, 2], strides = [1, 1]} : vector<8x32xf32> to vector<8x2xf32>
    %59 = vector.extract_strided_slice %39 {offsets = [0, 0], sizes = [8, 30], strides = [1, 1]} : vector<8x32xf32> to vector<8x30xf32>
    %60 = tpu.concatenate %58, %59 in 1 : vector<8x2xf32>, vector<8x30xf32> -> vector<8x32xf32>
    %c2_i32_20 = arith.constant 2 : i32
    %61 = vector.broadcast %c2_i32_20 : i32 to vector<8x32xi32>
    %62 = arith.cmpi sge, %57, %61 : vector<8x32xi32>
    %cst_21 = arith.constant 0.000000e+00 : f32
    %63 = vector.broadcast %cst_21 : f32 to vector<8x32xf32>
    %64 = arith.select %62, %60, %63 : vector<8x32xi1>, vector<8x32xf32>
    %65 = vector.extract_strided_slice %39 {offsets = [0, 31], sizes = [8, 1], strides = [1, 1]} : vector<8x32xf32> to vector<8x1xf32>
    %66 = vector.extract_strided_slice %39 {offsets = [0, 0], sizes = [8, 31], strides = [1, 1]} : vector<8x32xf32> to vector<8x31xf32>
    %67 = tpu.concatenate %65, %66 in 1 : vector<8x1xf32>, vector<8x31xf32> -> vector<8x32xf32>
    %c1_i32_22 = arith.constant 1 : i32
    %68 = vector.broadcast %c1_i32_22 : i32 to vector<8x32xi32>
    %69 = arith.cmpi sge, %57, %68 : vector<8x32xi32>
    %cst_23 = arith.constant 0.000000e+00 : f32
    %70 = vector.broadcast %cst_23 : f32 to vector<8x32xf32>
    %71 = arith.select %69, %67, %70 : vector<8x32xi1>, vector<8x32xf32>
    %72 = tpu.concatenate %64, %71, %39 in 0 : vector<8x32xf32>, vector<8x32xf32>, vector<8x32xf32> -> vector<24x32xf32>
    %cst_24 = arith.constant dense<0.000000e+00> : vector<8x32xf32>
    %73 = tpu.matmul %40, %72, %cst_24 {dimension_numbers = #tpu.dot_dimension_numbers<[1], [0], [0], [1], [0, 0, 1, 1], [], []>} : vector<8x24xf32>, vector<24x32xf32>, vector<8x32xf32> -> vector<8x32xf32>
    %c0_25 = arith.constant 0 : index
    %c0_26 = arith.constant 0 : index
    %74 = vector.load %arg5[%c0_25, %c0_26] : memref<8x1xf32, #tpu.memory_space<vmem>>, vector<8x1xf32>
    %75 = vector.broadcast %74 : vector<8x1xf32> to vector<8x32xf32>
    %76 = arith.addf %73, %75 : vector<8x32xf32>
    %cst_27 = arith.constant 0.000000e+00 : f32
    %77 = vector.broadcast %cst_27 : f32 to vector<8x32xf32>
    %78 = arith.maximumf %76, %77 : vector<8x32xf32>
    %c0_28 = arith.constant 0 : index
    %c0_29 = arith.constant 0 : index
    %79 = vector.load %arg6[%c0_28, %c0_29] : memref<8x4xf32, #tpu.memory_space<vmem>>, vector<8x4xf32>
    %cst_30 = arith.constant dense<0.000000e+00> : vector<8x32xf32>
    %80 = tpu.matmul %79, %0, %cst_30 {dimension_numbers = #tpu.dot_dimension_numbers<[1], [0], [0], [1], [0, 0, 1, 1], [], []>} : vector<8x4xf32>, vector<4x32xf32>, vector<8x32xf32> -> vector<8x32xf32>
    %c0_31 = arith.constant 0 : index
    %c0_32 = arith.constant 0 : index
    %81 = vector.load %arg7[%c0_31, %c0_32] : memref<8x1xf32, #tpu.memory_space<vmem>>, vector<8x1xf32>
    %82 = vector.broadcast %81 : vector<8x1xf32> to vector<8x32xf32>
    %83 = arith.addf %80, %82 : vector<8x32xf32>
    %84 = arith.addf %78, %83 : vector<8x32xf32>
    %cst_33 = arith.constant 0.000000e+00 : f32
    %85 = vector.broadcast %cst_33 : f32 to vector<8x32xf32>
    %86 = arith.maximumf %84, %85 : vector<8x32xf32>
    %c0_34 = arith.constant 0 : index
    %c0_35 = arith.constant 0 : index
    %87 = vector.load %arg8[%c0_34, %c0_35] : memref<8x32xf32, #tpu.memory_space<vmem>>, vector<8x32xf32>
    tpu.vector_store %arg8[%c0_34, %c0_35], %86 {strides = array<i32>} : memref<8x32xf32, #tpu.memory_space<vmem>>, vector<8x32xf32>,
    return
  }
  func.func @transform_0(%arg0: i32) -> (i32, i32) {
    %c0_i32 = arith.constant 0 : i32
    %c0_i32_0 = arith.constant 0 : i32
    return %c0_i32, %arg0 : i32, i32
  }
  func.func @transform_1(%arg0: i32) -> (i32, i32) {
    %c0_i32 = arith.constant 0 : i32
    %c0_i32_0 = arith.constant 0 : i32
    %c0_i32_1 = arith.constant 0 : i32
    return %c0_i32, %c0_i32_0 : i32, i32
  }
  func.func @transform_2(%arg0: i32) -> (i32, i32) {
    %c0_i32 = arith.constant 0 : i32
    %c0_i32_0 = arith.constant 0 : i32
    %c0_i32_1 = arith.constant 0 : i32
    return %c0_i32, %c0_i32_0 : i32, i32
  }
  func.func @transform_3(%arg0: i32) -> (i32, i32) {
    %c0_i32 = arith.constant 0 : i32
    %c0_i32_0 = arith.constant 0 : i32
    %c0_i32_1 = arith.constant 0 : i32
    return %c0_i32, %c0_i32_0 : i32, i32
  }
  func.func @transform_4(%arg0: i32) -> (i32, i32) {
    %c0_i32 = arith.constant 0 : i32
    %c0_i32_0 = arith.constant 0 : i32
    %c0_i32_1 = arith.constant 0 : i32
    return %c0_i32, %c0_i32_0 : i32, i32
  }
  func.func @transform_5(%arg0: i32) -> (i32, i32) {
    %c0_i32 = arith.constant 0 : i32
    %c0_i32_0 = arith.constant 0 : i32
    %c0_i32_1 = arith.constant 0 : i32
    return %c0_i32, %c0_i32_0 : i32, i32
  }
  func.func @transform_6(%arg0: i32) -> (i32, i32) {
    %c0_i32 = arith.constant 0 : i32
    %c0_i32_0 = arith.constant 0 : i32
    %c0_i32_1 = arith.constant 0 : i32
    return %c0_i32, %c0_i32_0 : i32, i32
  }
  func.func @transform_7(%arg0: i32) -> (i32, i32) {
    %c0_i32 = arith.constant 0 : i32
    %c0_i32_0 = arith.constant 0 : i32
    return %c0_i32, %arg0 : i32, i32
  }
}

module attributes {stable_mosaic.version = 11 : i64} {
  func.func @_dense_kernel(%arg0: i32, %arg1: memref<2x128xf32, #tpu.memory_space<vmem>>, %arg2: memref<128x8xf32, #tpu.memory_space<vmem>>, %arg3: memref<1x8xf32, #tpu.memory_space<vmem>>, %arg4: memref<2x8xf32, #tpu.memory_space<vmem>>, %arg5: memref<2x8xf32, #tpu.memory_space<vmem>>) attributes {dimension_semantics = [#tpu.dimension_semantics<arbitrary>], iteration_bounds = array<i64: 1>, scalar_prefetch = 0 : i64, scratch_operands = 1 : i64, tpu.core_type = #tpu.core_type<tc>, window_params = [{transform_indices = @transform_0, window_bounds = array<i64: 2, 128>}, {transform_indices = @transform_1, window_bounds = array<i64: 128, 8>}, {pipeline_mode = #tpu.pipeline_mode<synchronous>, transform_indices = @transform_2, window_bounds = array<i64: 1, 8>}, {pipeline_mode = #tpu.pipeline_mode<synchronous>, transform_indices = @transform_3, window_bounds = array<i64: 2, 8>}]} {
    %c0_i32 = arith.constant 0 : i32
    %0 = arith.cmpi eq, %arg0, %c0_i32 : i32
    %1 = arith.extui %0 : i1 to i32
    %c0_i32_0 = arith.constant 0 : i32
    %2 = arith.cmpi ne, %1, %c0_i32_0 : i32
    scf.if %2 {
      %cst_10 = arith.constant 0.000000e+00 : f32
      %12 = vector.broadcast %cst_10 : f32 to vector<2x8xf32>
      %c0_11 = arith.constant 0 : index
      %c0_12 = arith.constant 0 : index
      %13 = vector.load %arg5[%c0_11, %c0_12] : memref<2x8xf32, #tpu.memory_space<vmem>>, vector<2x8xf32>
      tpu.vector_store %arg5[%c0_11, %c0_12], %12 {strides = array<i32>} : memref<2x8xf32, #tpu.memory_space<vmem>>, vector<2x8xf32>,
    } else {
    }
    %c0 = arith.constant 0 : index
    %c0_1 = arith.constant 0 : index
    %3 = vector.load %arg5[%c0, %c0_1] : memref<2x8xf32, #tpu.memory_space<vmem>>, vector<2x8xf32>
    %c0_2 = arith.constant 0 : index
    %c0_3 = arith.constant 0 : index
    %4 = vector.load %arg1[%c0_2, %c0_3] : memref<2x128xf32, #tpu.memory_space<vmem>>, vector<2x128xf32>
    %c0_4 = arith.constant 0 : index
    %c0_5 = arith.constant 0 : index
    %5 = vector.load %arg2[%c0_4, %c0_5] : memref<128x8xf32, #tpu.memory_space<vmem>>, vector<128x8xf32>
    %cst = arith.constant dense<0.000000e+00> : vector<2x8xf32>
    %6 = tpu.matmul %4, %5, %cst {dimension_numbers = #tpu.dot_dimension_numbers<[1], [0], [0], [1], [0, 0, 1, 1], [], []>} : vector<2x128xf32>, vector<128x8xf32>, vector<2x8xf32> -> vector<2x8xf32>
    %7 = arith.addf %3, %6 : vector<2x8xf32>
    %c0_6 = arith.constant 0 : index
    %c0_7 = arith.constant 0 : index
    %8 = vector.load %arg5[%c0_6, %c0_7] : memref<2x8xf32, #tpu.memory_space<vmem>>, vector<2x8xf32>
    tpu.vector_store %arg5[%c0_6, %c0_7], %7 {strides = array<i32>} : memref<2x8xf32, #tpu.memory_space<vmem>>, vector<2x8xf32>,
    %c0_i32_8 = arith.constant 0 : i32
    %9 = arith.cmpi eq, %arg0, %c0_i32_8 : i32
    %10 = arith.extui %9 : i1 to i32
    %c0_i32_9 = arith.constant 0 : i32
    %11 = arith.cmpi ne, %10, %c0_i32_9 : i32
    scf.if %11 {
      %c0_10 = arith.constant 0 : index
      %c0_11 = arith.constant 0 : index
      %12 = vector.load %arg5[%c0_10, %c0_11] : memref<2x8xf32, #tpu.memory_space<vmem>>, vector<2x8xf32>
      %c0_12 = arith.constant 0 : index
      %c0_13 = arith.constant 0 : index
      %13 = vector.load %arg3[%c0_12, %c0_13] : memref<1x8xf32, #tpu.memory_space<vmem>>, vector<1x8xf32>
      %14 = vector.broadcast %13 : vector<1x8xf32> to vector<2x8xf32>
      %15 = arith.addf %12, %14 : vector<2x8xf32>
      %c0_14 = arith.constant 0 : index
      %c0_15 = arith.constant 0 : index
      %16 = vector.load %arg4[%c0_14, %c0_15] : memref<2x8xf32, #tpu.memory_space<vmem>>, vector<2x8xf32>
      tpu.vector_store %arg4[%c0_14, %c0_15], %15 {strides = array<i32>} : memref<2x8xf32, #tpu.memory_space<vmem>>, vector<2x8xf32>,
    } else {
    }
    return
  }
  func.func @transform_0(%arg0: i32) -> (i32, i32) {
    %c0_i32 = arith.constant 0 : i32
    %c0_i32_0 = arith.constant 0 : i32
    return %c0_i32, %arg0 : i32, i32
  }
  func.func @transform_1(%arg0: i32) -> (i32, i32) {
    %c0_i32 = arith.constant 0 : i32
    %c0_i32_0 = arith.constant 0 : i32
    return %arg0, %c0_i32 : i32, i32
  }
  func.func @transform_2(%arg0: i32) -> (i32, i32) {
    %c0_i32 = arith.constant 0 : i32
    %c0_i32_0 = arith.constant 0 : i32
    %c0_i32_1 = arith.constant 0 : i32
    return %c0_i32, %c0_i32_0 : i32, i32
  }
  func.func @transform_3(%arg0: i32) -> (i32, i32) {
    %c0_i32 = arith.constant 0 : i32
    %c0_i32_0 = arith.constant 0 : i32
    %c0_i32_1 = arith.constant 0 : i32
    return %c0_i32, %c0_i32_0 : i32, i32
  }
}

</mosaic_0001>

<llo_original>
// kernel: _lambda_.5
$region0: #{_lambda_.5}
  #allocation0 [shape = 'u32[]', space=smem, size = 0x4, offset = 0x4, fixed_abs, tag = 'smem constant byte address 0x4 - core index']
  #allocation1 [shape = 'u32[72,128]{1,0:T(1,128)}', space=vmem, size = 0x9000, scoped, tag = 'internal scratch']
  #allocation2 [shape = 'f32[2,8]{1,0:T(2,128)}', space=vmem, size = 0x400, scoped, tag = 'scratch operand']
  %s0 = inlined_call_operand.vmem [shape: f32[2,128], index: 0, kind: input, shape index: {}]
  %s1 = inlined_call_operand.vmem [shape: f32[128,8], index: 1, kind: input, shape index: {}]
  %s2 = inlined_call_operand.vmem [shape: f32[1,8], index: 2, kind: input, shape index: {}]
  %s3 = inlined_call_operand.hbm [shape: f32[2,8], index: 3, kind: output, shape index: {}]
  %s4 = sld [smem:[#allocation0]]
  $region30: #{_lambda_.5} parent=0
    _
  %s6 = ssub.s32 1, %s4
  %s7 = scalar_select 0, %s6, %s4
  $region1: #{_lambda_.5} parent=0
    #allocation3 [shape = 'u8[1024]{0}', space=vmem, size = 0x400, scoped, tag = 'output window, operand 0, single buffered']
    #allocation4 [shape = 's32[1]{0}', space=sflag, size = 0x4, scoped, tag = 'scoped memory for _lambda_.5']
    %8 = vsyncpa [#allocation4], 0
    // Predicated region
    $region2: #{_lambda_.5} parent=1 // pred_check
      _
    $region3: #{_lambda_.5} parent=1 // pred_check_branch
      %10 = sbr.rel (0) target = $region5
    $region4: #{_lambda_.5} parent=1 // pred_region
      _
    $region5: #{_lambda_.5} parent=1 // pred_fallthru
      _
    // Predicated region
    $region6: #{_lambda_.5} parent=1 // pred_check
      _
    $region7: #{_lambda_.5} parent=1 // pred_check_branch
      %12 = sbr.rel (0) target = $region9
    $region8: #{_lambda_.5} parent=1 // pred_region
      _
    $region9: #{_lambda_.5} parent=1 // pred_fallthru
      _
    // Predicated region
    $region10: #{_lambda_.5} parent=1 // pred_check
      _
    $region11: #{_lambda_.5} parent=1 // pred_check_branch
      %14 = sbr.rel (0) target = $region13
    $region12: #{_lambda_.5} parent=1 // pred_region
      _
    $region13: #{_lambda_.5} parent=1 // pred_fallthru
      _
    %p15 = scmp.eq.s32.totalorder 0, 0
    // Predicated region
    $region14: #{_lambda_.5} parent=1 // pred_check
      %p16 = pneg %p15
    $region15: #{_lambda_.5} parent=1 // pred_check_branch
      %18 = sbr.rel (%p16) target = $region17
    $region16: #{_lambda_.5} parent=1 // pred_region
      %vm19 = vcmask 58368
      %20 = vst.msk [vmem:[#allocation2] sm:$0x3] %vm19, 0.0
    $region17: #{_lambda_.5} parent=1 // pred_fallthru
      _
    %v21 = vld [vmem:[#allocation2] sm:$0x3]
    %v22 = vld [vmem:[%s0] sm:$0x3]
    %v23 = vld [vmem:[%s1] sm:$0xff]
    %v24 = vld [vmem:[%s1 + $0x8] sm:$0xff]
    %v25 = vld [vmem:[%s1 + $0x10] sm:$0xff]
    %v26 = vld [vmem:[%s1 + $0x18] sm:$0xff]
    %v27 = vld [vmem:[%s1 + $0x20] sm:$0xff]
    %v28 = vld [vmem:[%s1 + $0x28] sm:$0xff]
    %v29 = vld [vmem:[%s1 + $0x30] sm:$0xff]
    %v30 = vld [vmem:[%s1 + $0x38] sm:$0xff]
    %v31 = vld [vmem:[%s1 + $0x40] sm:$0xff]
    %v32 = vld [vmem:[%s1 + $0x48] sm:$0xff]
    %v33 = vld [vmem:[%s1 + $0x50] sm:$0xff]
    %v34 = vld [vmem:[%s1 + $0x58] sm:$0xff]
    %v35 = vld [vmem:[%s1 + $0x60] sm:$0xff]
    %v36 = vld [vmem:[%s1 + $0x68] sm:$0xff]
    %v37 = vld [vmem:[%s1 + $0x70] sm:$0xff]
    %v38 = vld [vmem:[%s1 + $0x78] sm:$0xff]
    %39 = vmatpush.msra.mxu0 %v38
    %40 = vmatpush.msra.mxu0 %v37
    %41 = vmatpush.msra.mxu0 %v36
    %42 = vmatpush.msra.mxu0 %v35
    %43 = vmatpush.msra.mxu0 %v34
    %44 = vmatpush.msra.mxu0 %v33
    %45 = vmatpush.msra.mxu0 %v32
    %46 = vmatpush.msra.mxu0 %v31
    %47 = vmatpush.msra.mxu0 %v30
    %48 = vmatpush.msra.mxu0 %v29
    %49 = vmatpush.msra.mxu0 %v28
    %50 = vmatpush.msra.mxu0 %v27
    %51 = vmatpush.msra.mxu0 %v26
    %52 = vmatpush.msra.mxu0 %v25
    %53 = vmatpush.msra.mxu0 %v24
    %54 = vmatpush.msra.mxu0 %v23
    %55 = vmatmul.f32.gmra.mxu0 %v22
    %v56 = vpop.f32.mrf.mxu0
    %v57 = vadd.f32 0.0, %v56
    %58 = vdwg.mxu0
    %v59 = vadd.f32 %v21, %v57
    %vm60 = vcmask 58368
    %61 = vst.msk [vmem:[#allocation2] sm:$0x3] %vm60, %v59
    // Predicated region
    $region18: #{_lambda_.5} parent=1 // pred_check
      %p62 = pneg %p15
    $region19: #{_lambda_.5} parent=1 // pred_check_branch
      %64 = sbr.rel (%p62) target = $region21
    $region20: #{_lambda_.5} parent=1 // pred_region
      %v65 = vld [vmem:[#allocation2] sm:$0x3]
      %v66 = vld [vmem:[%s2] sm:$0x1]
      %v68 = vperm.slane %v66, 0
      %v70 = vadd.f32 %v65, %v68
      %71 = vst.msk [vmem:[#allocation3] sm:$0x3] %vm60, %v70
    $region21: #{_lambda_.5} parent=1 // pred_fallthru
      _
    // Predicated region
    $region22: #{_lambda_.5} parent=1 // pred_check
      _
    $region23: #{_lambda_.5} parent=1 // pred_check_branch
      %73 = sbr.rel (0) target = $region25
    $region24: #{_lambda_.5} parent=1 // pred_region
      %75 = vsyncadd [#allocation4], 0
      %s77 = sshll.u32 [#allocation3], 4
      %s78 = int_to_ptr.vmem [resolvable:$true] %s77
      %s79 = sshll.u32 %s3, 4
      %s80 = int_to_ptr.hbm [resolvable:$true] %s79
      %82 = dma.vmem_to_hbm [thread:$0]  %s78, 32, %s80, [#allocation4]
    $region25: #{_lambda_.5} parent=1 // pred_fallthru
      _
    // Predicated region
    $region26: #{_lambda_.5} parent=1 // pred_check
      _
    $region27: #{_lambda_.5} parent=1 // pred_check_branch
      %84 = sbr.rel (0) target = $region29
    $region28: #{_lambda_.5} parent=1 // pred_region
      %86 = dma.done [#allocation4], 32
    $region29: #{_lambda_.5} parent=1 // pred_fallthru
      _
    %87 = vsyncpa [#allocation4], 1

// kernel: _lambda_.4
$region0: #{_lambda_.4}
  #allocation0 [shape = 'u32[]', space=smem, size = 0x4, offset = 0x4, fixed_abs, tag = 'smem constant byte address 0x4 - core index']
  #allocation1 [shape = 'u32[72,128]{1,0:T(1,128)}', space=vmem, size = 0x9000, scoped, tag = 'internal scratch']
  %s0 = inlined_call_operand.vmem [shape: f32[8,32], index: 0, kind: input, shape index: {}]
  %s1 = inlined_call_operand.vmem [shape: f32[8,24], index: 1, kind: input, shape index: {}]
  %s2 = inlined_call_operand.vmem [shape: f32[8,1], index: 2, kind: input, shape index: {}]
  %s3 = inlined_call_operand.vmem [shape: f32[8,24], index: 3, kind: input, shape index: {}]
  %s4 = inlined_call_operand.vmem [shape: f32[8,1], index: 4, kind: input, shape index: {}]
  %s5 = inlined_call_operand.vmem [shape: f32[8,32], index: 5, kind: output, shape index: {}]
  %s6 = sld [smem:[#allocation0]]
  $region30: #{_lambda_.4} parent=0
    _
  %s8 = ssub.s32 1, %s6
  %s9 = scalar_select 0, %s8, %s6
  // Predicated region
  $region2: #{_lambda_.4} parent=0 // pred_check
    _
  $region3: #{_lambda_.4} parent=0 // pred_check_branch
    %11 = sbr.rel (0) target = $region5
  $region4: #{_lambda_.4} parent=0 // pred_region
    _
  $region5: #{_lambda_.4} parent=0 // pred_fallthru
    _
  // Predicated region
  $region6: #{_lambda_.4} parent=0 // pred_check
    _
  $region7: #{_lambda_.4} parent=0 // pred_check_branch
    %13 = sbr.rel (0) target = $region9
  $region8: #{_lambda_.4} parent=0 // pred_region
    _
  $region9: #{_lambda_.4} parent=0 // pred_fallthru
    _
  // Predicated region
  $region10: #{_lambda_.4} parent=0 // pred_check
    _
  $region11: #{_lambda_.4} parent=0 // pred_check_branch
    %15 = sbr.rel (0) target = $region13
  $region12: #{_lambda_.4} parent=0 // pred_region
    _
  $region13: #{_lambda_.4} parent=0 // pred_fallthru
    _
  // Predicated region
  $region14: #{_lambda_.4} parent=0 // pred_check
    _
  $region15: #{_lambda_.4} parent=0 // pred_check_branch
    %17 = sbr.rel (0) target = $region17
  $region16: #{_lambda_.4} parent=0 // pred_region
    _
  $region17: #{_lambda_.4} parent=0 // pred_fallthru
    _
  // Predicated region
  $region18: #{_lambda_.4} parent=0 // pred_check
    _
  $region19: #{_lambda_.4} parent=0 // pred_check_branch
    %19 = sbr.rel (0) target = $region21
  $region20: #{_lambda_.4} parent=0 // pred_region
    _
  $region21: #{_lambda_.4} parent=0 // pred_fallthru
    _
  %v20 = vld [vmem:[%s0] sm:$0xff]
  %v21 = vld [vmem:[%s1] sm:$0xff]
  %v22 = vlaneseq
  %v23 = vand.u32 %v22, 127
  %vm24 = vcmp.lt.s32.totalorder %v23, 0
  %v25 = vsub.s32 0, %v23
  %v26 = vsel %vm24, %v25, %v23
  %v27 = vshrl.u32 %v26, 4
  %v28 = vand.u32 %v26, 15
  %v29 = vsub.s32 0, %v28
  %v30 = vsel %vm24, %v29, %v28
  %vm31 = vcmp.ne.s32.totalorder %v30, 0
  %vm32 = vcmp.lt.s32.totalorder %v30, 0
  %vm33 = vmand %vm32, %vm31
  %v34 = vadd.s32 %v30, 16
  %v35 = vsel %vm33, %v34, %v30
  %37 = vrot.lane.b32.xlu0 %v20, 100
  %v38 = vpop.permute.xlu0 %37
  %40 = vrot.lane.b32.xlu0 %v20, 4
  %v41 = vpop.permute.xlu0 %40
  %vm43 = vcmask 31744
  %v44 = vsel %vm43, %v38, %v41
  %vm45 = vcmp.ge.s32.totalorder %v35, 4
  %v46 = vsel %vm45, %v44, 0.0
  %47 = vrot.lane.b32.xlu0 %v20, 98
  %v48 = vpop.permute.xlu0 %47
  %50 = vrot.lane.b32.xlu0 %v20, 2
  %v51 = vpop.permute.xlu0 %50
  %vm53 = vcmask 15360
  %v54 = vsel %vm53, %v48, %v51
  %vm55 = vcmp.ge.s32.totalorder %v35, 2
  %v56 = vsel %vm55, %v54, 0.0
  %v57 = vld [vmem:[%s2] sm:$0xff]
  %59 = vset.pattern.permute.xlu0 0
  %60 = vperm.xlu0 %59, %v57
  %v61 = vpop.permute.xlu0 %60
  %vm63 = vcmask 195584
  %v65 = vsel %vm63, %v21, 0
  %67 = vmatpush.msra.mxu0 0.0
  %68 = vmatpush.msra.mxu0 0.0
  %69 = vmatpush.msra.mxu0 0.0
  %70 = vmatpush.msra.mxu0 0.0
  %71 = vmatpush.msra.mxu0 0.0
  %72 = vmatpush.msra.mxu0 0.0
  %73 = vmatpush.msra.mxu0 0.0
  %74 = vmatpush.msra.mxu0 0.0
  %75 = vmatpush.msra.mxu0 0.0
  %76 = vmatpush.msra.mxu0 0.0
  %77 = vmatpush.msra.mxu0 0.0
  %78 = vmatpush.msra.mxu0 0.0
  %79 = vmatpush.msra.mxu0 0.0
  %80 = vmatpush.msra.mxu0 %v20
  %81 = vmatpush.msra.mxu0 %v56
  %82 = vmatpush.msra.mxu0 %v46
  %83 = vmatmul.f32.gmra.mxu0 %v65
  %v84 = vpop.f32.mrf.mxu0
  %v85 = vadd.f32 %v61, %v84
  %86 = vdwg.mxu0
  %v87 = vmax.f32 %v85, 0.0
  %v88 = vld [vmem:[%s3] sm:$0xff]
  %90 = vrot.lane.b32.xlu0 %v87, 100
  %v91 = vpop.permute.xlu0 %90
  %93 = vrot.lane.b32.xlu0 %v87, 4
  %v94 = vpop.permute.xlu0 %93
  %v96 = vsel %vm43, %v91, %v94
  %v97 = vsel %vm45, %v96, 0.0
  %98 = vrot.lane.b32.xlu0 %v87, 98
  %v99 = vpop.permute.xlu0 %98
  %101 = vrot.lane.b32.xlu0 %v87, 2
  %v102 = vpop.permute.xlu0 %101
  %v104 = vsel %vm53, %v99, %v102
  %v105 = vsel %vm55, %v104, 0.0
  %v106 = vld [vmem:[%s4] sm:$0xff]
  %108 = vset.pattern.permute.xlu0 0
  %109 = vperm.xlu0 %108, %v106
  %v110 = vpop.permute.xlu0 %109
  %v113 = vsel %vm63, %v88, 0
  %115 = vmatpush.msra.mxu0 0.0
  %116 = vmatpush.msra.mxu0 0.0
  %117 = vmatpush.msra.mxu0 0.0
  %118 = vmatpush.msra.mxu0 0.0
  %119 = vmatpush.msra.mxu0 0.0
  %120 = vmatpush.msra.mxu0 0.0
  %121 = vmatpush.msra.mxu0 0.0
  %122 = vmatpush.msra.mxu0 0.0
  %123 = vmatpush.msra.mxu0 0.0
  %124 = vmatpush.msra.mxu0 0.0
  %125 = vmatpush.msra.mxu0 0.0
  %126 = vmatpush.msra.mxu0 0.0
  %127 = vmatpush.msra.mxu0 0.0
  %128 = vmatpush.msra.mxu0 %v87
  %129 = vmatpush.msra.mxu0 %v105
  %130 = vmatpush.msra.mxu0 %v97
  %131 = vmatmul.f32.gmra.mxu0 %v113
  %v132 = vpop.f32.mrf.mxu0
  %v133 = vadd.f32 %v110, %v132
  %134 = vdwg.mxu0
  %v135 = vmax.f32 %v133, 0.0
  %v136 = vadd.f32 %v135, %v20
  %v137 = vmax.f32 %v136, 0.0
  %vm138 = vcmask 261120
  %139 = vst.msk [vmem:[%s5] sm:$0xff] %vm138, %v137
  // Predicated region
  $region22: #{_lambda_.4} parent=0 // pred_check
    _
  $region23: #{_lambda_.4} parent=0 // pred_check_branch
    %141 = sbr.rel (0) target = $region25
  $region24: #{_lambda_.4} parent=0 // pred_region
    _
  $region25: #{_lambda_.4} parent=0 // pred_fallthru
    _
  // Predicated region
  $region26: #{_lambda_.4} parent=0 // pred_check
    _
  $region27: #{_lambda_.4} parent=0 // pred_check_branch
    %143 = sbr.rel (0) target = $region29
  $region28: #{_lambda_.4} parent=0 // pred_region
    _
  $region29: #{_lambda_.4} parent=0 // pred_fallthru
    _

// kernel: _lambda_.3
$region0: #{_lambda_.3}
  #allocation0 [shape = 'u32[]', space=smem, size = 0x4, offset = 0x4, fixed_abs, tag = 'smem constant byte address 0x4 - core index']
  #allocation1 [shape = 'u32[72,128]{1,0:T(1,128)}', space=vmem, size = 0x9000, scoped, tag = 'internal scratch']
  %s0 = inlined_call_operand.vmem [shape: f32[4,32], index: 0, kind: input, shape index: {}]
  %s1 = inlined_call_operand.vmem [shape: f32[8,12], index: 1, kind: input, shape index: {}]
  %s2 = inlined_call_operand.vmem [shape: f32[8,1], index: 2, kind: input, shape index: {}]
  %s3 = inlined_call_operand.vmem [shape: f32[8,24], index: 3, kind: input, shape index: {}]
  %s4 = inlined_call_operand.vmem [shape: f32[8,1], index: 4, kind: input, shape index: {}]
  %s5 = inlined_call_operand.vmem [shape: f32[8,4], index: 5, kind: input, shape index: {}]
  %s6 = inlined_call_operand.vmem [shape: f32[8,1], index: 6, kind: input, shape index: {}]
  %s7 = inlined_call_operand.vmem [shape: f32[8,32], index: 7, kind: output, shape index: {}]
  %s8 = sld [smem:[#allocation0]]
  $region38: #{_lambda_.3} parent=0
    _
  %s10 = ssub.s32 1, %s8
  %s11 = scalar_select 0, %s10, %s8
  // Predicated region
  $region2: #{_lambda_.3} parent=0 // pred_check
    _
  $region3: #{_lambda_.3} parent=0 // pred_check_branch
    %13 = sbr.rel (0) target = $region5
  $region4: #{_lambda_.3} parent=0 // pred_region
    _
  $region5: #{_lambda_.3} parent=0 // pred_fallthru
    _
  // Predicated region
  $region6: #{_lambda_.3} parent=0 // pred_check
    _
  $region7: #{_lambda_.3} parent=0 // pred_check_branch
    %15 = sbr.rel (0) target = $region9
  $region8: #{_lambda_.3} parent=0 // pred_region
    _
  $region9: #{_lambda_.3} parent=0 // pred_fallthru
    _
  // Predicated region
  $region10: #{_lambda_.3} parent=0 // pred_check
    _
  $region11: #{_lambda_.3} parent=0 // pred_check_branch
    %17 = sbr.rel (0) target = $region13
  $region12: #{_lambda_.3} parent=0 // pred_region
    _
  $region13: #{_lambda_.3} parent=0 // pred_fallthru
    _
  // Predicated region
  $region14: #{_lambda_.3} parent=0 // pred_check
    _
  $region15: #{_lambda_.3} parent=0 // pred_check_branch
    %19 = sbr.rel (0) target = $region17
  $region16: #{_lambda_.3} parent=0 // pred_region
    _
  $region17: #{_lambda_.3} parent=0 // pred_fallthru
    _
  // Predicated region
  $region18: #{_lambda_.3} parent=0 // pred_check
    _
  $region19: #{_lambda_.3} parent=0 // pred_check_branch
    %21 = sbr.rel (0) target = $region21
  $region20: #{_lambda_.3} parent=0 // pred_region
    _
  $region21: #{_lambda_.3} parent=0 // pred_fallthru
    _
  // Predicated region
  $region22: #{_lambda_.3} parent=0 // pred_check
    _
  $region23: #{_lambda_.3} parent=0 // pred_check_branch
    %23 = sbr.rel (0) target = $region25
  $region24: #{_lambda_.3} parent=0 // pred_region
    _
  $region25: #{_lambda_.3} parent=0 // pred_fallthru
    _
  // Predicated region
  $region26: #{_lambda_.3} parent=0 // pred_check
    _
  $region27: #{_lambda_.3} parent=0 // pred_check_branch
    %25 = sbr.rel (0) target = $region29
  $region28: #{_lambda_.3} parent=0 // pred_region
    _
  $region29: #{_lambda_.3} parent=0 // pred_fallthru
    _
  %v26 = vld [vmem:[%s0] sm:$0xf]
  %v27 = vld [vmem:[%s1] sm:$0xff]
  %v28 = vlaneseq
  %v29 = vand.u32 %v28, 127
  %vm30 = vcmp.lt.s32.totalorder %v29, 0
  %v31 = vsub.s32 0, %v29
  %v32 = vsel %vm30, %v31, %v29
  %v33 = vshrl.u32 %v32, 4
  %v34 = vand.u32 %v32, 15
  %v35 = vsub.s32 0, %v34
  %v36 = vsel %vm30, %v35, %v34
  %vm37 = vcmp.ne.s32.totalorder %v36, 0
  %vm38 = vcmp.lt.s32.totalorder %v36, 0
  %vm39 = vmand %vm38, %vm37
  %v40 = vadd.s32 %v36, 16
  %v41 = vsel %vm39, %v40, %v36
  %43 = vrot.lane.b32.xlu0 %v26, 98
  %v44 = vpop.permute.xlu0 %43
  %46 = vrot.lane.b32.xlu0 %v26, 2
  %v47 = vpop.permute.xlu0 %46
  %vm49 = vcmask 15360
  %v50 = vsel %vm49, %v44, %v47
  %vm51 = vcmp.ge.s32.totalorder %v41, 2
  %v52 = vsel %vm51, %v50, 0.0
  %53 = vrot.lane.b32.xlu0 %v26, 97
  %v54 = vpop.permute.xlu0 %53
  %56 = vrot.lane.b32.xlu0 %v26, 1
  %v57 = vpop.permute.xlu0 %56
  %vm59 = vcmask 7168
  %v60 = vsel %vm59, %v54, %v57
  %vm61 = vcmp.ge.s32.totalorder %v41, 1
  %v62 = vsel %vm61, %v60, 0.0
  %v64 = vrot.slane %v62, 4
  %vm66 = vcmask 1043456
  %v67 = vsel %vm66, %v52, %v64
  %v68 = vld [vmem:[%s2] sm:$0xff]
  %70 = vset.pattern.permute.xlu0 0
  %71 = vperm.xlu0 %70, %v68
  %v72 = vpop.permute.xlu0 %71
  %vm74 = vcmask 97280
  %v76 = vsel %vm74, %v27, 0
  %v78 = vsel %vm66, %v26, 0
  %80 = vmatpush.msra.mxu0 0.0
  %81 = vmatpush.msra.mxu0 0.0
  %82 = vmatpush.msra.mxu0 0.0
  %83 = vmatpush.msra.mxu0 0.0
  %84 = vmatpush.msra.mxu0 0.0
  %85 = vmatpush.msra.mxu0 0.0
  %86 = vmatpush.msra.mxu0 0.0
  %87 = vmatpush.msra.mxu0 0.0
  %88 = vmatpush.msra.mxu0 0.0
  %89 = vmatpush.msra.mxu0 0.0
  %90 = vmatpush.msra.mxu0 0.0
  %91 = vmatpush.msra.mxu0 0.0
  %92 = vmatpush.msra.mxu0 0.0
  %93 = vmatpush.msra.mxu0 0.0
  %94 = vmatpush.msra.mxu0 %v78
  %95 = vmatpush.msra.mxu0 %v67
  %96 = vmatmul.f32.gmra.mxu0 %v76
  %v97 = vpop.f32.mrf.mxu0
  %v98 = vadd.f32 %v72, %v97
  %99 = vdwg.mxu0
  %v100 = vmax.f32 %v98, 0.0
  %v101 = vld [vmem:[%s3] sm:$0xff]
  %103 = vrot.lane.b32.xlu0 %v100, 98
  %v104 = vpop.permute.xlu0 %103
  %106 = vrot.lane.b32.xlu0 %v100, 2
  %v107 = vpop.permute.xlu0 %106
  %v109 = vsel %vm49, %v104, %v107
  %v110 = vsel %vm51, %v109, 0.0
  %111 = vrot.lane.b32.xlu0 %v100, 97
  %v112 = vpop.permute.xlu0 %111
  %114 = vrot.lane.b32.xlu0 %v100, 1
  %v115 = vpop.permute.xlu0 %114
  %v117 = vsel %vm59, %v112, %v115
  %v118 = vsel %vm61, %v117, 0.0
  %v119 = vld [vmem:[%s4] sm:$0xff]
  %121 = vset.pattern.permute.xlu0 0
  %122 = vperm.xlu0 %121, %v119
  %v123 = vpop.permute.xlu0 %122
  %vm125 = vcmask 195584
  %v127 = vsel %vm125, %v101, 0
  %129 = vmatpush.msra.mxu0 0.0
  %130 = vmatpush.msra.mxu0 0.0
  %131 = vmatpush.msra.mxu0 0.0
  %132 = vmatpush.msra.mxu0 0.0
  %133 = vmatpush.msra.mxu0 0.0
  %134 = vmatpush.msra.mxu0 0.0
  %135 = vmatpush.msra.mxu0 0.0
  %136 = vmatpush.msra.mxu0 0.0
  %137 = vmatpush.msra.mxu0 0.0
  %138 = vmatpush.msra.mxu0 0.0
  %139 = vmatpush.msra.mxu0 0.0
  %140 = vmatpush.msra.mxu0 0.0
  %141 = vmatpush.msra.mxu0 0.0
  %142 = vmatpush.msra.mxu0 %v100
  %143 = vmatpush.msra.mxu0 %v118
  %144 = vmatpush.msra.mxu0 %v110
  %145 = vmatmul.f32.gmra.mxu0 %v127
  %v146 = vpop.f32.mrf.mxu0
  %v147 = vadd.f32 %v123, %v146
  %148 = vdwg.mxu0
  %v149 = vmax.f32 %v147, 0.0
  %v150 = vld [vmem:[%s5] sm:$0xff]
  %v151 = vld [vmem:[%s6] sm:$0xff]
  %153 = vset.pattern.permute.xlu0 0
  %154 = vperm.xlu0 %153, %v151
  %v155 = vpop.permute.xlu0 %154
  %vm157 = vcmask 31744
  %v159 = vsel %vm157, %v150, 0
  %161 = vmatpush.msra.mxu0 0.0
  %162 = vmatpush.msra.mxu0 0.0
  %163 = vmatpush.msra.mxu0 0.0
  %164 = vmatpush.msra.mxu0 0.0
  %165 = vmatpush.msra.mxu0 0.0
  %166 = vmatpush.msra.mxu0 0.0
  %167 = vmatpush.msra.mxu0 0.0
  %168 = vmatpush.msra.mxu0 0.0
  %169 = vmatpush.msra.mxu0 0.0
  %170 = vmatpush.msra.mxu0 0.0
  %171 = vmatpush.msra.mxu0 0.0
  %172 = vmatpush.msra.mxu0 0.0
  %173 = vmatpush.msra.mxu0 0.0
  %174 = vmatpush.msra.mxu0 0.0
  %175 = vmatpush.msra.mxu0 0.0
  %176 = vmatpush.msra.mxu0 %v78
  %177 = vmatmul.f32.gmra.mxu0 %v159
  %v178 = vpop.f32.mrf.mxu0
  %v179 = vadd.f32 %v155, %v178
  %180 = vdwg.mxu0
  %v181 = vadd.f32 %v149, %v179
  %v182 = vmax.f32 %v181, 0.0
  %vm183 = vcmask 261120
  %184 = vst.msk [vmem:[%s7] sm:$0xff] %vm183, %v182
  // Predicated region
  $region30: #{_lambda_.3} parent=0 // pred_check
    _
  $region31: #{_lambda_.3} parent=0 // pred_check_branch
    %186 = sbr.rel (0) target = $region33
  $region32: #{_lambda_.3} parent=0 // pred_region
    _
  $region33: #{_lambda_.3} parent=0 // pred_fallthru
    _
  // Predicated region
  $region34: #{_lambda_.3} parent=0 // pred_check
    _
  $region35: #{_lambda_.3} parent=0 // pred_check_branch
    %188 = sbr.rel (0) target = $region37
  $region36: #{_lambda_.3} parent=0 // pred_region
    _
  $region37: #{_lambda_.3} parent=0 // pred_fallthru
    _

</llo_original>
